<compile_context>
chip_gen: v6e
topology: v6e:2x2x1
jax: 0.10.0
libtpu: 0.0.40
codegen_flags: <defaults>
</compile_context>

<pallas_src>
import functools

import jax
import jax.numpy as jnp
from jax.experimental import pallas as pl
from jax.experimental.pallas import tpu as pltpu

CLASS_COUNT = 5
HIDDEN = 128
C_PAD = 128          # lane-dense padded class dimension for the MXU / softmax
C_OUT = 8            # narrow logits writeback (>= CLASS_COUNT, = full out array dim)
NEG_INF = -1e30


def _round_up(n, m):
    return ((n + m - 1) // m) * m


def _choose_tiling(batch, max_tile_b):
    """Pick (tile_b, padded_batch). Prefers tiles that divide the 8-rounded batch."""
    cap = max(8, (max_tile_b // 8) * 8)
    b8 = _round_up(batch, 8)
    if b8 <= cap:
        return b8, b8
    floor = max(8, cap // 4)
    for t in range(cap, floor - 1, -8):
        if b8 % t == 0:
            return t, b8                      # no batch-pad copy needed
    return cap, _round_up(b8, cap)            # fall back to padding


# ---------------------------------------------------------------------------
# Pallas kernels
# ---------------------------------------------------------------------------
def _logits_from_refs(x_ref, w1_ref, b1_ref, w2_ref, b2_ref, use_bf16):
    x = x_ref[...]                                                     # (TB, D)
    w1 = w1_ref[...]
    w2 = w2_ref[...]
    if use_bf16:
        x, w1, w2 = (x.astype(jnp.bfloat16), w1.astype(jnp.bfloat16),
                     w2.astype(jnp.bfloat16))
    h = jnp.dot(x, w1, preferred_element_type=jnp.float32) + b1_ref[...]
    h = jnp.maximum(h, 0.0)                                            # ReLU
    if use_bf16:
        h = h.astype(jnp.bfloat16)
    return jnp.dot(h, w2, preferred_element_type=jnp.float32) + b2_ref[...]


def _mlp_kernel(x_ref, w1_ref, b1_ref, w2_ref, b2_ref, out_ref, *, use_bf16):
    """fc1 -> ReLU -> fc2 for one batch tile; narrow (TB, C_OUT) writeback."""
    logits = _logits_from_refs(x_ref, w1_ref, b1_ref, w2_ref, b2_ref, use_bf16)
    out_ref[...] = logits[:, :out_ref.shape[-1]].astype(out_ref.dtype)


def _mlp_ce_kernel(x_ref, y_ref, w1_ref, b1_ref, w2_ref, b2_ref, loss_ref,
                   *, batch, tile_b, use_bf16):
    """Fused fc1 -> ReLU -> fc2 -> cross-entropy partial sum for one batch tile.

    Each tile writes its own (1,1,1) partial (already scaled by 1/batch), so the
    batch-tile grid axis stays fully parallel (megacore-friendly on v7x).
    """
    i = pl.program_id(0)
    logits = _logits_from_refs(x_ref, w1_ref, b1_ref, w2_ref, b2_ref, use_bf16)

    # Mask padded class columns (zero-padded w2/b2 would corrupt the softmax norm).
    col = jax.lax.broadcasted_iota(jnp.int32, logits.shape, 1)         # (TB, 128)
    logits = jnp.where(col < CLASS_COUNT, logits, NEG_INF)

    # Numerically stable log-softmax in f32 (exp/log ride the EUP).
    m = jnp.max(logits, axis=-1, keepdims=True)
    z = logits - m
    lse = jnp.log(jnp.sum(jnp.exp(z), axis=-1, keepdims=True))
    logp = z - lse

    # Per-row log-prob at the target class via one-hot select.
    y = y_ref[...]                                                     # (TB, 1) int32
    onehot = (col == y).astype(jnp.float32)
    nll = -jnp.sum(onehot * logp, axis=-1, keepdims=True)              # (TB, 1)

    # Zero-out any batch-padding rows.
    row = jax.lax.broadcasted_iota(jnp.int32, nll.shape, 0) + i * tile_b
    nll = jnp.where(row < batch, nll, 0.0)

    partial = jnp.sum(nll, axis=0, keepdims=True) * (1.0 / batch)      # (1, 1)
    loss_ref[...] = partial.reshape(1, 1, 1)


# ---------------------------------------------------------------------------
# Wrappers
# ---------------------------------------------------------------------------
def init_params(input_size, key):
    """Deterministic init mimicking nn.Linear's U(-1/sqrt(fan_in), 1/sqrt(fan_in))."""
    k1, k2, k3, k4 = jax.random.split(key, 4)
    lim1 = 1.0 / jnp.sqrt(jnp.float32(input_size))
    lim2 = 1.0 / jnp.sqrt(jnp.float32(HIDDEN))
    w1 = jax.random.uniform(k1, (input_size, HIDDEN), jnp.float32, -lim1, lim1)
    b1 = jax.random.uniform(k2, (1, HIDDEN), jnp.float32, -lim1, lim1)
    w2 = jax.random.uniform(k3, (HIDDEN, CLASS_COUNT), jnp.float32, -lim2, lim2)
    b2 = jax.random.uniform(k4, (1, CLASS_COUNT), jnp.float32, -lim2, lim2)
    return w1, b1, w2, b2


def prepare_params(params):
    """One-time lane-dense padding of the class dimension (5 -> 128 columns)."""
    w1, b1, w2, b2 = params
    w2p = jnp.pad(w2, ((0, 0), (0, C_PAD - CLASS_COUNT)))
    b2p = jnp.pad(b2, ((0, 0), (0, C_PAD - CLASS_COUNT)))
    return w1, b1, w2p, b2p


def torch_model_forward(prepared_params, x, y=None, *, max_tile_b=1024,
                        use_bf16_matmul=False):
    """Pallas equivalent of TorchModel.forward: logits if y is None, else scalar loss."""
    w1, b1, w2p, b2p = prepared_params
    B, D = x.shape

    tile_b, b_pad = _choose_tiling(B, max_tile_b)
    n_tiles = b_pad // tile_b
    xp = jnp.pad(x, ((0, b_pad - B), (0, 0))) if b_pad != B else x

    x_spec = pl.BlockSpec((tile_b, D), lambda i: (i, 0))
    w1_spec = pl.BlockSpec((D, HIDDEN), lambda i: (0, 0))
    b1_spec = pl.BlockSpec((1, HIDDEN), lambda i: (0, 0))
    w2_spec = pl.BlockSpec((HIDDEN, C_PAD), lambda i: (0, 0))
    b2_spec = pl.BlockSpec((1, C_PAD), lambda i: (0, 0))

    matmul_flops = 2 * b_pad * (D * HIDDEN + HIDDEN * C_PAD)
    weight_bytes = 4 * (D * HIDDEN + HIDDEN + HIDDEN * C_PAD + C_PAD)

    # VMEM budget (double-buffered streamed x/out + resident weights + scratch);
    # only raise the scoped limit if we would exceed the 32 MiB default (v7x-safe).
    vmem_est = 4 * (2 * tile_b * D + 2 * tile_b * C_OUT
                    + tile_b * (HIDDEN + C_PAD)
                    + 2 * (D * HIDDEN + HIDDEN + HIDDEN * C_PAD + C_PAD))
    cp_kwargs = dict(dimension_semantics=("parallel",))
    if vmem_est > (30 << 20):
        cp_kwargs["vmem_limit_bytes"] = min(int(vmem_est * 3 // 2), 60 << 20)

    if y is None:
        logits_full = pl.pallas_call(
            functools.partial(_mlp_kernel, use_bf16=use_bf16_matmul),
            out_shape=jax.ShapeDtypeStruct((b_pad, C_OUT), jnp.float32),
            grid=(n_tiles,),
            in_specs=[x_spec, w1_spec, b1_spec, w2_spec, b2_spec],
            out_specs=pl.BlockSpec((tile_b, C_OUT), lambda i: (i, 0)),
            compiler_params=pltpu.CompilerParams(**cp_kwargs),
            cost_estimate=pl.CostEstimate(
                flops=matmul_flops,
                transcendentals=0,
                bytes_accessed=weight_bytes + 4 * (b_pad * D + b_pad * C_OUT)),
        )(xp, w1, b1, w2p, b2p)
        return logits_full[:B, :CLASS_COUNT]

    y2d = y.astype(jnp.int32).reshape(B, 1)
    yp = jnp.pad(y2d, ((0, b_pad - B), (0, 0))) if b_pad != B else y2d
    y_spec = pl.BlockSpec((tile_b, 1), lambda i: (i, 0))

    partials = pl.pallas_call(
        functools.partial(_mlp_ce_kernel, batch=B, tile_b=tile_b,
                          use_bf16=use_bf16_matmul),
        out_shape=jax.ShapeDtypeStruct((n_tiles, 1, 1), jnp.float32),
        grid=(n_tiles,),
        in_specs=[x_spec, y_spec, w1_spec, b1_spec, w2_spec, b2_spec],
        out_specs=pl.BlockSpec((1, 1, 1), lambda i: (i, 0, 0)),
        compiler_params=pltpu.CompilerParams(**cp_kwargs),
        cost_estimate=pl.CostEstimate(
            flops=matmul_flops,
            transcendentals=b_pad * (C_PAD + 1),
            bytes_accessed=weight_bytes + 4 * (b_pad * D + b_pad + n_tiles)),
    )(xp, yp, w1, b1, w2p, b2p)
    return jnp.sum(partials)


# ---------------------------------------------------------------------------
# Main
# ---------------------------------------------------------------------------
if __name__ == "__main__":
    input_size = 32

    key = jax.random.PRNGKey(0)
    k_params, k_data = jax.random.split(key, 2)

    raw_params = init_params(input_size, k_params)
    params = prepare_params(raw_params)          # padded once, reused across calls
    w1, b1, w2, b2 = raw_params

    def reference(x, y=None):
        h = jnp.maximum(x @ w1 + b1, 0.0)
        logits = h @ w2 + b2
        if y is None:
            return logits
        logp = jax.nn.log_softmax(logits, axis=-1)
        return -jnp.mean(logp[jnp.arange(x.shape[0]), y])

    # (batch, max_tile_b): single tile / padded remainder tile / multi-tile parallel loss.
    cases = ((8, 1024), (12, 1024), (32, 8))
    for batch, max_tile in cases:
        k_data, kx, ky = jax.random.split(k_data, 3)
        x = jax.random.normal(kx, (batch, input_size), dtype=jnp.float32)
        y = jax.random.randint(ky, (batch,), 0, CLASS_COUNT, dtype=jnp.int32)

        logits = jax.block_until_ready(
            torch_model_forward(params, x, max_tile_b=max_tile))
        loss = jax.block_until_ready(
            torch_model_forward(params, x, y, max_tile_b=max_tile))

        assert logits.shape == (batch, CLASS_COUNT)
        assert jnp.allclose(logits, reference(x), atol=1e-5, rtol=1e-5)
        assert jnp.allclose(loss, reference(x, y), atol=1e-5, rtol=1e-5)

    print("KERNEL_OK")
</pallas_src>

<mosaic_0001>
module attributes {stable_mosaic.version = 11 : i64} {
  func.func @_mlp_kernel(%arg0: i32, %arg1: memref<8x32xf32, #tpu.memory_space<vmem>>, %arg2: memref<32x128xf32, #tpu.memory_space<vmem>>, %arg3: memref<1x128xf32, #tpu.memory_space<vmem>>, %arg4: memref<128x128xf32, #tpu.memory_space<vmem>>, %arg5: memref<1x128xf32, #tpu.memory_space<vmem>>, %arg6: memref<8x8xf32, #tpu.memory_space<vmem>>) attributes {dimension_semantics = [#tpu.dimension_semantics<parallel>], iteration_bounds = array<i64: 1>, scalar_prefetch = 0 : i64, scratch_operands = 0 : i64, tpu.core_type = #tpu.core_type<tc>, window_params = [{transform_indices = @transform_0, window_bounds = array<i64: 8, 32>}, {pipeline_mode = #tpu.pipeline_mode<synchronous>, transform_indices = @transform_1, window_bounds = array<i64: 32, 128>}, {pipeline_mode = #tpu.pipeline_mode<synchronous>, transform_indices = @transform_2, window_bounds = array<i64: 1, 128>}, {pipeline_mode = #tpu.pipeline_mode<synchronous>, transform_indices = @transform_3, window_bounds = array<i64: 128, 128>}, {pipeline_mode = #tpu.pipeline_mode<synchronous>, transform_indices = @transform_4, window_bounds = array<i64: 1, 128>}, {transform_indices = @transform_5, window_bounds = array<i64: 8, 8>}]} {
    %c0 = arith.constant 0 : index
    %c0_0 = arith.constant 0 : index
    %0 = vector.load %arg1[%c0, %c0_0] : memref<8x32xf32, #tpu.memory_space<vmem>>, vector<8x32xf32>
    %c0_1 = arith.constant 0 : index
    %c0_2 = arith.constant 0 : index
    %1 = vector.load %arg2[%c0_1, %c0_2] : memref<32x128xf32, #tpu.memory_space<vmem>>, vector<32x128xf32>
    %c0_3 = arith.constant 0 : index
    %c0_4 = arith.constant 0 : index
    %2 = vector.load %arg4[%c0_3, %c0_4] : memref<128x128xf32, #tpu.memory_space<vmem>>, vector<128x128xf32>
    %cst = arith.constant dense<0.000000e+00> : vector<8x128xf32>
    %3 = tpu.matmul %0, %1, %cst {dimension_numbers = #tpu.dot_dimension_numbers<[1], [0], [0], [1], [0, 0, 1, 1], [], []>} : vector<8x32xf32>, vector<32x128xf32>, vector<8x128xf32> -> vector<8x128xf32>
    %c0_5 = arith.constant 0 : index
    %c0_6 = arith.constant 0 : index
    %4 = vector.load %arg3[%c0_5, %c0_6] : memref<1x128xf32, #tpu.memory_space<vmem>>, vector<1x128xf32>
    %5 = vector.broadcast %4 : vector<1x128xf32> to vector<8x128xf32>
    %6 = arith.addf %3, %5 : vector<8x128xf32>
    %cst_7 = arith.constant 0.000000e+00 : f32
    %7 = vector.broadcast %cst_7 : f32 to vector<8x128xf32>
    %8 = arith.maximumf %6, %7 : vector<8x128xf32>
    %cst_8 = arith.constant dense<0.000000e+00> : vector<8x128xf32>
    %9 = tpu.matmul %8, %2, %cst_8 {dimension_numbers = #tpu.dot_dimension_numbers<[1], [0], [0], [1], [0, 0, 1, 1], [], []>} : vector<8x128xf32>, vector<128x128xf32>, vector<8x128xf32> -> vector<8x128xf32>
    %c0_9 = arith.constant 0 : index
    %c0_10 = arith.constant 0 : index
    %10 = vector.load %arg5[%c0_9, %c0_10] : memref<1x128xf32, #tpu.memory_space<vmem>>, vector<1x128xf32>
    %11 = vector.broadcast %10 : vector<1x128xf32> to vector<8x128xf32>
    %12 = arith.addf %9, %11 : vector<8x128xf32>
    %13 = vector.extract_strided_slice %12 {offsets = [0, 0], sizes = [8, 8], strides = [1, 1]} : vector<8x128xf32> to vector<8x8xf32>
    %c0_11 = arith.constant 0 : index
    %c0_12 = arith.constant 0 : index
    %14 = vector.load %arg6[%c0_11, %c0_12] : memref<8x8xf32, #tpu.memory_space<vmem>>, vector<8x8xf32>
    tpu.vector_store %arg6[%c0_11, %c0_12], %13 {strides = array<i32>} : memref<8x8xf32, #tpu.memory_space<vmem>>, vector<8x8xf32>,
    return
  }
  func.func @transform_0(%arg0: i32) -> (i32, i32) {
    %c0_i32 = arith.constant 0 : i32
    %c0_i32_0 = arith.constant 0 : i32
    return %arg0, %c0_i32 : i32, i32
  }
  func.func @transform_1(%arg0: i32) -> (i32, i32) {
    %c0_i32 = arith.constant 0 : i32
    %c0_i32_0 = arith.constant 0 : i32
    %c0_i32_1 = arith.constant 0 : i32
    return %c0_i32, %c0_i32_0 : i32, i32
  }
  func.func @transform_2(%arg0: i32) -> (i32, i32) {
    %c0_i32 = arith.constant 0 : i32
    %c0_i32_0 = arith.constant 0 : i32
    %c0_i32_1 = arith.constant 0 : i32
    return %c0_i32, %c0_i32_0 : i32, i32
  }
  func.func @transform_3(%arg0: i32) -> (i32, i32) {
    %c0_i32 = arith.constant 0 : i32
    %c0_i32_0 = arith.constant 0 : i32
    %c0_i32_1 = arith.constant 0 : i32
    return %c0_i32, %c0_i32_0 : i32, i32
  }
  func.func @transform_4(%arg0: i32) -> (i32, i32) {
    %c0_i32 = arith.constant 0 : i32
    %c0_i32_0 = arith.constant 0 : i32
    %c0_i32_1 = arith.constant 0 : i32
    return %c0_i32, %c0_i32_0 : i32, i32
  }
  func.func @transform_5(%arg0: i32) -> (i32, i32) {
    %c0_i32 = arith.constant 0 : i32
    %c0_i32_0 = arith.constant 0 : i32
    return %arg0, %c0_i32 : i32, i32
  }
}

</mosaic_0001>

<llo_original>
// kernel: tpu_custom_call.1
$region0: #{tpu_custom_call.1}
  #allocation0 [shape = 'u32[]', space=smem, size = 0x4, offset = 0x4, fixed_abs, tag = 'smem constant byte address 0x4 - core index']
  #allocation1 [shape = 'u32[144,128]{1,0:T(1,128)}', space=vmem, size = 0x12000, scoped, tag = 'internal scratch']
  %s0 = inlined_call_operand.hbm [shape: f32[8,32], index: 0, kind: input, shape index: {}]
  %s1 = inlined_call_operand.hbm [shape: f32[32,128], index: 1, kind: input, shape index: {}]
  %s2 = inlined_call_operand.vmem [shape: f32[1,128], index: 2, kind: input, shape index: {}]
  %s3 = inlined_call_operand.hbm [shape: f32[128,128], index: 3, kind: input, shape index: {}]
  %s4 = inlined_call_operand.vmem [shape: f32[1,128], index: 4, kind: input, shape index: {}]
  %s5 = inlined_call_operand.hbm [shape: f32[8,8], index: 5, kind: output, shape index: {}]
  %s6 = sld [smem:[#allocation0]]
  $region42: #{tpu_custom_call.1} parent=0
    _
  %s8 = ssub.s32 1, %s6
  %s9 = scalar_select 0, %s8, %s6
  $region1: #{tpu_custom_call.1} parent=0
    #allocation2 [shape = 'u8[4096]{0}', space=vmem, size = 0x1000, scoped, tag = 'input window, operand 0, single buffered']
    #allocation3 [shape = 's32[1]{0}', space=sflag, size = 0x4, scoped, tag = 'scoped memory for tpu_custom_call.1']
    #allocation4 [shape = 's32[1]{0}', space=sflag, size = 0x4, scoped, tag = 'scoped memory for tpu_custom_call.1']
    #allocation5 [shape = 'u8[16384]{0}', space=vmem, size = 0x4000, scoped, tag = 'input window, operand 1, single buffered']
    #allocation6 [shape = 's32[1]{0}', space=sflag, size = 0x4, scoped, tag = 'scoped memory for tpu_custom_call.1']
    #allocation7 [shape = 'u8[65536]{0}', space=vmem, size = 0x10000, scoped, tag = 'input window, operand 3, single buffered']
    #allocation8 [shape = 'u8[4096]{0}', space=vmem, size = 0x1000, scoped, tag = 'output window, operand 0, single buffered']
    %10 = vsyncpa [#allocation3], 0
    %11 = vsyncpa [#allocation6], 0
    %12 = vsyncpa [#allocation4], 0
    // Predicated region
    $region2: #{tpu_custom_call.1} parent=1 // pred_check
      _
    $region3: #{tpu_custom_call.1} parent=1 // pred_check_branch
      %14 = sbr.rel (0) target = $region5
    $region4: #{tpu_custom_call.1} parent=1 // pred_region
      %s16 = ssub.s32 128, 128
      %17 = vsyncadd [#allocation3], %s16
      %s19 = sshll.u32 [#allocation2], 4
      %s20 = int_to_ptr.vmem [resolvable:$true] %s19
      %22 = dma.hbm_to_vmem [thread:$0]  %s0, 128, %s20, [#allocation3]
    $region5: #{tpu_custom_call.1} parent=1 // pred_fallthru
      _
    // Predicated region
    $region6: #{tpu_custom_call.1} parent=1 // pred_check
      _
    $region7: #{tpu_custom_call.1} parent=1 // pred_check_branch
      %24 = sbr.rel (0) target = $region9
    $region8: #{tpu_custom_call.1} parent=1 // pred_region
      %s26 = ssub.s32 512, 512
      %27 = vsyncadd [#allocation6], %s26
      %s28 = sshll.u32 [#allocation5], 4
      %s29 = int_to_ptr.vmem [resolvable:$true] %s28
      %34 = dma.hbm_to_vmem [thread:$0]  %s1, 512, %s29, [#allocation6], 128, 128, 8
    $region9: #{tpu_custom_call.1} parent=1 // pred_fallthru
      _
    // Predicated region
    $region10: #{tpu_custom_call.1} parent=1 // pred_check
      _
    $region11: #{tpu_custom_call.1} parent=1 // pred_check_branch
      %36 = sbr.rel (0) target = $region13
    $region12: #{tpu_custom_call.1} parent=1 // pred_region
      _
    $region13: #{tpu_custom_call.1} parent=1 // pred_fallthru
      _
    // Predicated region
    $region14: #{tpu_custom_call.1} parent=1 // pred_check
      _
    $region15: #{tpu_custom_call.1} parent=1 // pred_check_branch
      %38 = sbr.rel (0) target = $region17
    $region16: #{tpu_custom_call.1} parent=1 // pred_region
      %s40 = ssub.s32 2048, 2048
      %41 = vsyncadd [#allocation6], %s40
      %s42 = sshll.u32 [#allocation7], 4
      %s43 = int_to_ptr.vmem [resolvable:$true] %s42
      %48 = dma.hbm_to_vmem [thread:$0]  %s3, 2048, %s43, [#allocation6], 128, 128, 8
    $region17: #{tpu_custom_call.1} parent=1 // pred_fallthru
      _
    // Predicated region
    $region18: #{tpu_custom_call.1} parent=1 // pred_check
      _
    $region19: #{tpu_custom_call.1} parent=1 // pred_check_branch
      %50 = sbr.rel (0) target = $region21
    $region20: #{tpu_custom_call.1} parent=1 // pred_region
      _
    $region21: #{tpu_custom_call.1} parent=1 // pred_fallthru
      _
    // Predicated region
    $region22: #{tpu_custom_call.1} parent=1 // pred_check
      _
    $region23: #{tpu_custom_call.1} parent=1 // pred_check_branch
      %52 = sbr.rel (0) target = $region25
    $region24: #{tpu_custom_call.1} parent=1 // pred_region
      %53 = dma.done [#allocation3], 128
    $region25: #{tpu_custom_call.1} parent=1 // pred_fallthru
      _
    // Predicated region
    $region26: #{tpu_custom_call.1} parent=1 // pred_check
      _
    $region27: #{tpu_custom_call.1} parent=1 // pred_check_branch
      %55 = sbr.rel (0) target = $region29
    $region28: #{tpu_custom_call.1} parent=1 // pred_region
      %56 = dma.done [#allocation6], 512
    $region29: #{tpu_custom_call.1} parent=1 // pred_fallthru
      _
    // Predicated region
    $region30: #{tpu_custom_call.1} parent=1 // pred_check
      _
    $region31: #{tpu_custom_call.1} parent=1 // pred_check_branch
      %58 = sbr.rel (0) target = $region33
    $region32: #{tpu_custom_call.1} parent=1 // pred_region
      %59 = dma.done [#allocation6], 2048
    $region33: #{tpu_custom_call.1} parent=1 // pred_fallthru
      _
    %v60 = vld [vmem:[#allocation2] sm:$0xff]
    %v61 = vld [vmem:[#allocation5] sm:$0xff]
    %v62 = vld [vmem:[#allocation5 + $0x8] sm:$0xff]
    %v63 = vld [vmem:[#allocation5 + $0x10] sm:$0xff]
    %v64 = vld [vmem:[#allocation5 + $0x18] sm:$0xff]
    %v65 = vld [vmem:[#allocation7] sm:$0xff]
    %v66 = vld [vmem:[#allocation7 + $0x8] sm:$0xff]
    %v67 = vld [vmem:[#allocation7 + $0x10] sm:$0xff]
    %v68 = vld [vmem:[#allocation7 + $0x18] sm:$0xff]
    %v69 = vld [vmem:[#allocation7 + $0x20] sm:$0xff]
    %v70 = vld [vmem:[#allocation7 + $0x28] sm:$0xff]
    %v71 = vld [vmem:[#allocation7 + $0x30] sm:$0xff]
    %v72 = vld [vmem:[#allocation7 + $0x38] sm:$0xff]
    %v73 = vld [vmem:[#allocation7 + $0x40] sm:$0xff]
    %v74 = vld [vmem:[#allocation7 + $0x48] sm:$0xff]
    %v75 = vld [vmem:[#allocation7 + $0x50] sm:$0xff]
    %v76 = vld [vmem:[#allocation7 + $0x58] sm:$0xff]
    %v77 = vld [vmem:[#allocation7 + $0x60] sm:$0xff]
    %v78 = vld [vmem:[#allocation7 + $0x68] sm:$0xff]
    %v79 = vld [vmem:[#allocation7 + $0x70] sm:$0xff]
    %v80 = vld [vmem:[#allocation7 + $0x78] sm:$0xff]
    %v81 = vld [vmem:[%s2] sm:$0x1]
    %v83 = vlaneseq
    %v84 = vshrl.u32 %v83, 7
    %v85 = vsub.s32 0, %v84
    %v86 = vrot.slane %v81, %v85
    %vm88 = vcmask 261120
    %v90 = vsel %vm88, %v60, 0
    %92 = vmatprep.subr.mxu0 0.0
    %93 = vmatpush1.msra.mxu0 0.0
    %94 = vmatprep.subr.mxu0 0.0
    %95 = vmatpush1.msra.mxu0 0.0
    %96 = vmatprep.subr.mxu0 0.0
    %97 = vmatpush1.msra.mxu0 0.0
    %98 = vmatprep.subr.mxu0 0.0
    %99 = vmatpush1.msra.mxu0 0.0
    %100 = vmatprep.subr.mxu0 0.0
    %101 = vmatpush1.msra.mxu0 0.0
    %102 = vmatprep.subr.mxu0 0.0
    %103 = vmatpush1.msra.mxu0 0.0
    %104 = vmatprep.subr.mxu0 0.0
    %105 = vmatpush1.msra.mxu0 0.0
    %106 = vmatprep.subr.mxu0 0.0
    %107 = vmatpush1.msra.mxu0 0.0
    %108 = vmatprep.subr.mxu0 0.0
    %109 = vmatpush1.msra.mxu0 0.0
    %110 = vmatprep.subr.mxu0 0.0
    %111 = vmatpush1.msra.mxu0 0.0
    %112 = vmatprep.subr.mxu0 0.0
    %113 = vmatpush1.msra.mxu0 0.0
    %114 = vmatprep.subr.mxu0 0.0
    %115 = vmatpush1.msra.mxu0 0.0
    %116 = vmatprep.subr.mxu0 0.0
    %117 = vmatpush1.msra.mxu0 %v64
    %118 = vmatprep.subr.mxu0 0.0
    %119 = vmatpush1.msra.mxu0 %v63
    %120 = vmatprep.subr.mxu0 0.0
    %121 = vmatpush1.msra.mxu0 %v62
    %122 = vmatprep.subr.mxu0 0.0
    %123 = vmatpush1.msra.mxu0 %v61
    %124 = vmatprep.subr.mxu0 0.0
    %125 = vmatpush2.msra.mxu0 0.0
    %126 = vmatprep.subr.mxu0 0.0
    %127 = vmatpush2.msra.mxu0 0.0
    %128 = vmatprep.subr.mxu0 0.0
    %129 = vmatpush2.msra.mxu0 0.0
    %130 = vmatprep.subr.mxu0 0.0
    %131 = vmatpush2.msra.mxu0 0.0
    %132 = vmatprep.subr.mxu0 0.0
    %133 = vmatpush2.msra.mxu0 0.0
    %134 = vmatprep.subr.mxu0 0.0
    %135 = vmatpush2.msra.mxu0 0.0
    %136 = vmatprep.subr.mxu0 0.0
    %137 = vmatpush2.msra.mxu0 0.0
    %138 = vmatprep.subr.mxu0 0.0
    %139 = vmatpush2.msra.mxu0 0.0
    %140 = vmatprep.subr.mxu0 0.0
    %141 = vmatpush2.msra.mxu0 0.0
    %142 = vmatprep.subr.mxu0 0.0
    %143 = vmatpush2.msra.mxu0 0.0
    %144 = vmatprep.subr.mxu0 0.0
    %145 = vmatpush2.msra.mxu0 0.0
    %146 = vmatprep.subr.mxu0 0.0
    %147 = vmatpush2.msra.mxu0 0.0
    %148 = vmatprep.subr.mxu0 0.0
    %149 = vmatpush2.msra.mxu0 0.0
    %150 = vmatprep.subr.mxu0 0.0
    %151 = vmatpush2.msra.mxu0 0.0
    %152 = vmatprep.subr.mxu0 0.0
    %153 = vmatpush2.msra.mxu0 0.0
    %154 = vmatprep.subr.mxu0 0.0
    %155 = vmatpush2.msra.mxu0 0.0
    %156 = vmatprep.mubr.f32.mxu0 0.0
    %157 = vmatmul.mubr.f32.gmra.mxu0 %v90
    %v158 = vpop.f32.mrf.mxu0
    %v159 = vadd.f32 %v86, %v158
    %v160 = vpop.f32.mrf.mxu0
    %161 = vdwg.mxu0
    %v162 = vmax.f32 %v159, 0.0
    %v163 = vld [vmem:[%s4] sm:$0x1]
    %v165 = vlaneseq
    %v166 = vshrl.u32 %v165, 7
    %v167 = vsub.s32 0, %v166
    %v168 = vrot.slane %v163, %v167
    %170 = vmatprep.subr.mxu0 0.0
    %171 = vmatpush1.msra.mxu0 %v80
    %172 = vmatprep.subr.mxu0 0.0
    %173 = vmatpush1.msra.mxu0 %v79
    %174 = vmatprep.subr.mxu0 0.0
    %175 = vmatpush1.msra.mxu0 %v78
    %176 = vmatprep.subr.mxu0 0.0
    %177 = vmatpush1.msra.mxu0 %v77
    %178 = vmatprep.subr.mxu0 0.0
    %179 = vmatpush1.msra.mxu0 %v76
    %180 = vmatprep.subr.mxu0 0.0
    %181 = vmatpush1.msra.mxu0 %v75
    %182 = vmatprep.subr.mxu0 0.0
    %183 = vmatpush1.msra.mxu0 %v74
    %184 = vmatprep.subr.mxu0 0.0
    %185 = vmatpush1.msra.mxu0 %v73
    %186 = vmatprep.subr.mxu0 0.0
    %187 = vmatpush1.msra.mxu0 %v72
    %188 = vmatprep.subr.mxu0 0.0
    %189 = vmatpush1.msra.mxu0 %v71
    %190 = vmatprep.subr.mxu0 0.0
    %191 = vmatpush1.msra.mxu0 %v70
    %192 = vmatprep.subr.mxu0 0.0
    %193 = vmatpush1.msra.mxu0 %v69
    %194 = vmatprep.subr.mxu0 0.0
    %195 = vmatpush1.msra.mxu0 %v68
    %196 = vmatprep.subr.mxu0 0.0
    %197 = vmatpush1.msra.mxu0 %v67
    %198 = vmatprep.subr.mxu0 0.0
    %199 = vmatpush1.msra.mxu0 %v66
    %200 = vmatprep.subr.mxu0 0.0
    %201 = vmatpush1.msra.mxu0 %v65
    %202 = vmatprep.subr.mxu0 0.0
    %203 = vmatpush2.msra.mxu0 0.0
    %204 = vmatprep.subr.mxu0 0.0
    %205 = vmatpush2.msra.mxu0 0.0
    %206 = vmatprep.subr.mxu0 0.0
    %207 = vmatpush2.msra.mxu0 0.0
    %208 = vmatprep.subr.mxu0 0.0
    %209 = vmatpush2.msra.mxu0 0.0
    %210 = vmatprep.subr.mxu0 0.0
    %211 = vmatpush2.msra.mxu0 0.0
    %212 = vmatprep.subr.mxu0 0.0
    %213 = vmatpush2.msra.mxu0 0.0
    %214 = vmatprep.subr.mxu0 0.0
    %215 = vmatpush2.msra.mxu0 0.0
    %216 = vmatprep.subr.mxu0 0.0
    %217 = vmatpush2.msra.mxu0 0.0
    %218 = vmatprep.subr.mxu0 0.0
    %219 = vmatpush2.msra.mxu0 0.0
    %220 = vmatprep.subr.mxu0 0.0
    %221 = vmatpush2.msra.mxu0 0.0
    %222 = vmatprep.subr.mxu0 0.0
    %223 = vmatpush2.msra.mxu0 0.0
    %224 = vmatprep.subr.mxu0 0.0
    %225 = vmatpush2.msra.mxu0 0.0
    %226 = vmatprep.subr.mxu0 0.0
    %227 = vmatpush2.msra.mxu0 0.0
    %228 = vmatprep.subr.mxu0 0.0
    %229 = vmatpush2.msra.mxu0 0.0
    %230 = vmatprep.subr.mxu0 0.0
    %231 = vmatpush2.msra.mxu0 0.0
    %232 = vmatprep.subr.mxu0 0.0
    %233 = vmatpush2.msra.mxu0 0.0
    %234 = vmatprep.mubr.f32.mxu0 0.0
    %235 = vmatmul.mubr.f32.gmra.mxu0 %v162
    %v236 = vpop.f32.mrf.mxu0
    %v237 = vadd.f32 %v168, %v236
    %v238 = vpop.f32.mrf.mxu0
    %239 = vdwg.mxu0
    %vm240 = vcmask 64512
    %241 = vst.msk [vmem:[#allocation8] sm:$0xff] %vm240, %v237
    // Predicated region
    $region34: #{tpu_custom_call.1} parent=1 // pred_check
      _
    $region35: #{tpu_custom_call.1} parent=1 // pred_check_branch
      %243 = sbr.rel (0) target = $region37
    $region36: #{tpu_custom_call.1} parent=1 // pred_region
      %s245 = ssub.s32 128, 128
      %246 = vsyncadd [#allocation4], %s245
      %s248 = sshll.u32 [#allocation8], 4
      %s249 = int_to_ptr.vmem [resolvable:$true] %s248
      %251 = dma.vmem_to_hbm [thread:$0]  %s249, 128, %s5, [#allocation4]
    $region37: #{tpu_custom_call.1} parent=1 // pred_fallthru
      _
    // Predicated region
    $region38: #{tpu_custom_call.1} parent=1 // pred_check
      _
    $region39: #{tpu_custom_call.1} parent=1 // pred_check_branch
      %253 = sbr.rel (0) target = $region41
    $region40: #{tpu_custom_call.1} parent=1 // pred_region
      %254 = dma.done [#allocation4], 128
    $region41: #{tpu_custom_call.1} parent=1 // pred_fallthru
      _
    %255 = vsyncpa [#allocation3], 1
    %256 = vsyncpa [#allocation6], 1
    %257 = vsyncpa [#allocation4], 1

</llo_original>
